<compile_context>
chip_gen: v7x
topology: tpu7x:2x2x1
jax: 0.10.0
libtpu: 0.0.40
codegen_flags: <defaults>
</compile_context>

<pallas_src>
import jax
import jax.numpy as jnp
from jax.experimental import pallas as pl
from jax.experimental.pallas import tpu as pltpu

_LANES = 128
_TARGET_TILE_BYTES = 4 << 20     # ~4 MiB per (double-buffered) tile
_VMEM_LIMIT_BYTES = 32 << 20     # safe on v5e/v6e (128 MiB phys) and v7x (64 MiB phys)


def _swish_kernel(beta_ref, x_ref, o_ref):
    # beta_ref: SMEM scalar (1,1) f32; x_ref/o_ref: VMEM tiles.
    beta = beta_ref[0, 0]
    x = x_ref[...]
    xf = x.astype(jnp.float32)
    bx = beta * xf

    # Numerically-stable, exact sigmoid(bx):
    #   bx >= 0:  1 / (1 + e^-bx)        bx < 0:  e^bx / (1 + e^bx)
    # exp lands on the EUP slot; select + divide are VPU filler (kernel is DMA-bound).
    # e is in (0, 1] and the denominator in [1, 2], so no inf/NaN even for masked
    # garbage rows in the ragged last block.
    e = jnp.exp(-jnp.abs(bx))
    num = jnp.where(bx >= 0, 1.0, e)
    sig = num / (1.0 + e)

    o_ref[...] = (xf * sig).astype(o_ref.dtype)


def _swish_slab(x2d, beta_smem):
    """Run the kernel on a lane-dense (rows, 128) slab."""
    rows, lanes = x2d.shape
    itemsize = jnp.dtype(x2d.dtype).itemsize
    # sublane packing granularity: 8 rows for 4-byte, 16 for 2-byte, 32 for 1-byte dtypes
    pack = 8 * max(1, 4 // itemsize)
    n = rows * lanes

    # Byte-budgeted tile rows (~4 MiB per buffer), rounded down to pack granularity.
    tile_rows = max(pack, (_TARGET_TILE_BYTES // (lanes * itemsize)) // pack * pack)

    steps = pl.cdiv(rows, tile_rows)
    if rows >= 2 * pack:
        # v7x has 2 TensorCores: make sure the "parallel" grid axis has at least 2
        # steps, and keep the step count even so the cores stay load-balanced.
        steps = max(2, steps)
        steps += steps % 2
    tr = min(rows, pl.cdiv(pl.cdiv(rows, steps), pack) * pack)
    grid = (pl.cdiv(rows, tr),)   # Pallas masks the ragged last block

    return pl.pallas_call(
        _swish_kernel,
        out_shape=jax.ShapeDtypeStruct((rows, lanes), x2d.dtype),
        grid_spec=pl.GridSpec(
            grid=grid,
            in_specs=[
                pl.BlockSpec(memory_space=pltpu.SMEM),            # beta scalar
                pl.BlockSpec((tr, lanes), lambda i: (i, 0)),      # x tile
            ],
            out_specs=pl.BlockSpec((tr, lanes), lambda i: (i, 0)),
        ),
        compiler_params=pltpu.CompilerParams(
            dimension_semantics=("parallel",),
            vmem_limit_bytes=_VMEM_LIMIT_BYTES,
        ),
        cost_estimate=pl.CostEstimate(
            flops=7 * n,
            transcendentals=n,
            bytes_accessed=2 * n * itemsize + 4,
        ),
    )(beta_smem, x2d)


def swish(x: jnp.ndarray, beta) -> jnp.ndarray:
    """Elementwise Swish with learnable scalar beta.
    Matches torch: input * sigmoid(beta * input); same shape/dtype as input."""
    orig_shape = x.shape
    orig_dtype = x.dtype
    n = x.size
    if n == 0:
        return x

    beta_smem = jnp.asarray(beta, dtype=jnp.float32).reshape(1, 1)
    n_main = (n // _LANES) * _LANES

    if n_main == n:
        # Fast path: zero-copy reshape to a lane-dense slab (no pad/unpad traffic).
        out2d = _swish_slab(x.reshape(n // _LANES, _LANES), beta_smem)
        return out2d.reshape(orig_shape)

    # Ragged-lane fallback: kernel on the lane-aligned prefix, <=127-element tail in
    # plain JAX (avoids the old full-tensor pad + unpad HBM passes).
    flat = x.reshape(-1)
    pieces = []
    if n_main > 0:
        main2d = _swish_slab(flat[:n_main].reshape(n_main // _LANES, _LANES), beta_smem)
        pieces.append(main2d.reshape(-1))
    tail = flat[n_main:].astype(jnp.float32)
    b = jnp.asarray(beta, dtype=jnp.float32)
    pieces.append((tail * jax.nn.sigmoid(b * tail)).astype(orig_dtype))
    return jnp.concatenate(pieces).reshape(orig_shape)


if __name__ == "__main__":
    key = jax.random.PRNGKey(0)
    # NCHW input, small shapes: batch=2, channels=4, spatial=16x16
    x = jax.random.normal(key, (2, 4, 16, 16), dtype=jnp.float32)
    # Deterministic parameter init, matching nn.Parameter(torch.tensor(1.0))
    beta = jnp.float32(1.0)

    out = swish(x, beta)
    out = jax.block_until_ready(out)

    # sanity check against pure-JAX reference
    ref = x * jax.nn.sigmoid(beta * x)
    assert out.shape == x.shape and out.dtype == x.dtype
    assert jnp.max(jnp.abs(out - ref)) < 1e-5

    print("KERNEL_OK")
</pallas_src>

<mosaic_0001>
module attributes {stable_mosaic.version = 11 : i64} {
  func.func @_swish_kernel(%arg0: i32, %arg1: memref<1x1xf32, #tpu.memory_space<smem>>, %arg2: memref<8x128xf32, #tpu.memory_space<vmem>>, %arg3: memref<8x128xf32, #tpu.memory_space<vmem>>) attributes {dimension_semantics = [#tpu.dimension_semantics<parallel>], iteration_bounds = array<i64: 2>, scalar_prefetch = 0 : i64, scratch_operands = 0 : i64, tpu.core_type = #tpu.core_type<tc>, window_params = [{transform_indices = @transform_0, window_bounds = array<i64: 1, 1>}, {transform_indices = @transform_1, window_bounds = array<i64: 8, 128>}, {transform_indices = @transform_2, window_bounds = array<i64: 8, 128>}]} {
    %c0 = arith.constant 0 : index
    %c0_0 = arith.constant 0 : index
    %0 = memref.load %arg1[%c0, %c0_0] : memref<1x1xf32, #tpu.memory_space<smem>>
    %c0_1 = arith.constant 0 : index
    %c0_2 = arith.constant 0 : index
    %1 = vector.load %arg2[%c0_1, %c0_2] : memref<8x128xf32, #tpu.memory_space<vmem>>, vector<8x128xf32>
    %2 = vector.broadcast %0 : f32 to vector<8x128xf32>
    %3 = arith.mulf %2, %1 : vector<8x128xf32>
    %4 = math.absf %3 : vector<8x128xf32>
    %cst = arith.constant 0.000000e+00 : f32
    %5 = vector.broadcast %cst : f32 to vector<8x128xf32>
    %6 = arith.subf %5, %4 : vector<8x128xf32>
    %7 = math.exp %6 : vector<8x128xf32>
    %cst_3 = arith.constant 0.000000e+00 : f32
    %8 = vector.broadcast %cst_3 : f32 to vector<8x128xf32>
    %9 = arith.cmpf oge, %3, %8 : vector<8x128xf32>
    %cst_4 = arith.constant 1.000000e+00 : f32
    %10 = vector.broadcast %cst_4 : f32 to vector<8x128xf32>
    %11 = arith.select %9, %10, %7 : vector<8x128xi1>, vector<8x128xf32>
    %cst_5 = arith.constant 1.000000e+00 : f32
    %12 = vector.broadcast %cst_5 : f32 to vector<8x128xf32>
    %13 = arith.addf %12, %7 : vector<8x128xf32>
    %14 = arith.divf %11, %13 : vector<8x128xf32>
    %15 = arith.mulf %1, %14 : vector<8x128xf32>
    %c0_6 = arith.constant 0 : index
    %c0_7 = arith.constant 0 : index
    %16 = vector.load %arg3[%c0_6, %c0_7] : memref<8x128xf32, #tpu.memory_space<vmem>>, vector<8x128xf32>
    tpu.vector_store %arg3[%c0_6, %c0_7], %15 {strides = array<i32>} : memref<8x128xf32, #tpu.memory_space<vmem>>, vector<8x128xf32>,
    return
  }
  func.func @transform_0(%arg0: i32) -> (i32, i32) {
    %c0_i32 = arith.constant 0 : i32
    %c0_i32_0 = arith.constant 0 : i32
    %c0_i32_1 = arith.constant 0 : i32
    return %c0_i32, %c0_i32_0 : i32, i32
  }
  func.func @transform_1(%arg0: i32) -> (i32, i32) {
    %c0_i32 = arith.constant 0 : i32
    %c0_i32_0 = arith.constant 0 : i32
    return %arg0, %c0_i32 : i32, i32
  }
  func.func @transform_2(%arg0: i32) -> (i32, i32) {
    %c0_i32 = arith.constant 0 : i32
    %c0_i32_0 = arith.constant 0 : i32
    return %arg0, %c0_i32 : i32, i32
  }
}

</mosaic_0001>

<llo_original>
// kernel: tpu_custom_call.1
$region0: #{tpu_custom_call.1}
  #allocation0 [shape = 'u32[]', space=smem, size = 0x4, offset = 0x4, fixed_abs, tag = 'smem constant byte address 0x4 - core index']
  #allocation1 [shape = 'u32[144,128]{1,0:T(1,128)}', space=vmem, size = 0x12000, scoped, tag = 'internal scratch']
  #allocation2 [shape = 'f32[1,1]{1,0:T(1,128)S(6)}', space=smem, size = 0x200, scoped, tag = 'scoped memory for tpu_custom_call.1']
  %s0 = inlined_call_operand.<no memory space> [shape: f32[1,1], index: 0, kind: input, shape index: {}]
  %s1 = inlined_call_operand.hbm [shape: f32[16,128], index: 1, kind: input, shape index: {}]
  %s2 = inlined_call_operand.hbm [shape: f32[16,128], index: 2, kind: output, shape index: {}]
  %s3 = sld [smem:[#allocation0]]
  $region45: #{tpu_custom_call.1} parent=0
    _
  %s5 = ssub.s32 1, %s3
  %s6 = scalar_select 0, %s5, %s3
  %7 = sst [smem:[#allocation2]] %s0
  $region1: #{tpu_custom_call.1} parent=0
    #allocation3 [shape = 'u8[8192]{0}', space=vmem, size = 0x2000, scoped, tag = 'input window, operand 1']
    #allocation4 [shape = 's32[2]{0}', space=sflag, size = 0x8, scoped, tag = 'scoped memory for tpu_custom_call.1']
    #allocation5 [shape = 's32[2]{0}', space=sflag, size = 0x8, scoped, tag = 'scoped memory for tpu_custom_call.1']
    #allocation6 [shape = 'u8[8192]{0}', space=vmem, size = 0x2000, scoped, tag = 'output window, operand 0']
    %8 = vsyncpa [#allocation4], 0
    %s9 = scalar_lea.sflag [#allocation4], 1
    %10 = vsyncpa %s9, 0
    %11 = vsyncpa [#allocation5], 0
    %s12 = scalar_lea.sflag [#allocation5], 1
    %13 = vsyncpa %s12, 0
    loop: start=0, step=1, limit=4
    $region2: #{tpu_custom_call.1} parent=1 // loop_pre_header
      _
    $region3: #{tpu_custom_call.1} parent=1 // loop_header
      %s15 = sphi 0, %s19
      %p16 = scmp.ge.s32.totalorder %s15, 4
      %s23 = sphi 0, %s23
      %s25 = sphi 0, %s23
      %s26 = sphi 0, %s25
      %s40 = sphi 0, %s26
      %s46 = sphi 0, %s48
      %s49 = sphi 0, %s46
      %s50 = sphi 0, %s49
      %s66 = sphi 0, %s50
      %s72 = sphi 0, %s74
      %s75 = sphi 0, %s72
      %s76 = sphi 0, %s75
      %s92 = sphi 0, %s76
    $region4: #{tpu_custom_call.1} parent=1 // loop_header_branch
      %18 = sbr.rel (%p16) target = $region8
    $region5: #{tpu_custom_call.1} parent=1 // loop_body
      %s20 = ssub.s32 %s15, 1
      %s21 = ssub.s32 %s15, 2
      %s22 = sadd.s32 %s15, 1
      %s24 = sadd.s32 %s23, 1
      %p27 = scmp.eq.s32.totalorder %s15, 1
      %p28 = scmp.ne.s32.totalorder %s23, %s25
      %p29 = scmp.eq.s32.totalorder %s15, 0
      %p30 = por %p28, %p29
      %p31 = scmp.ne.s32.totalorder %s23, %s25
      %p32 = scmp.eq.s32.totalorder %s20, 1
      %p33 = por %p31, %p32
      %p34 = scmp.ne.s32.totalorder %s25, %s26
      %p35 = scmp.eq.s32.totalorder %s20, 0
      %p36 = por %p34, %p35
      %p37 = scmp.ne.s32.totalorder %s25, %s26
      %p38 = scmp.eq.s32.totalorder %s21, 1
      %p39 = por %p37, %p38
      %p41 = scmp.ne.s32.totalorder %s26, %s40
      %p42 = scmp.eq.s32.totalorder %s21, 0
      %p43 = por %p41, %p42
      %s44 = ssub.s32 %s15, %s22
      %p45 = scmp.eq.s32.totalorder %s44, 0
      %s47 = sadd.s32 %s46, 1
      %s48 = scalar_select %p45, %s46, %s47
      %p51 = pneg %p45
      %p52 = scmp.eq.s32.totalorder %s15, 1
      %p53 = por %p51, %p52
      %p54 = scmp.ne.s32.totalorder %s46, %s49
      %p55 = scmp.eq.s32.totalorder %s15, 0
      %p56 = por %p54, %p55
      %p57 = scmp.ne.s32.totalorder %s46, %s49
      %p58 = scmp.eq.s32.totalorder %s20, 1
      %p59 = por %p57, %p58
      %p60 = scmp.ne.s32.totalorder %s49, %s50
      %p61 = scmp.eq.s32.totalorder %s20, 0
      %p62 = por %p60, %p61
      %p63 = scmp.ne.s32.totalorder %s49, %s50
      %p64 = scmp.eq.s32.totalorder %s21, 1
      %p65 = por %p63, %p64
      %p67 = scmp.ne.s32.totalorder %s50, %s66
      %p68 = scmp.eq.s32.totalorder %s21, 0
      %p69 = por %p67, %p68
      %s70 = ssub.s32 %s15, %s22
      %p71 = scmp.eq.s32.totalorder %s70, 0
      %s73 = sadd.s32 %s72, 1
      %s74 = scalar_select %p71, %s72, %s73
      %p77 = pneg %p71
      %p78 = scmp.eq.s32.totalorder %s15, 1
      %p79 = por %p77, %p78
      %p80 = scmp.ne.s32.totalorder %s72, %s75
      %p81 = scmp.eq.s32.totalorder %s15, 0
      %p82 = por %p80, %p81
      %p83 = scmp.ne.s32.totalorder %s72, %s75
      %p84 = scmp.eq.s32.totalorder %s20, 1
      %p85 = por %p83, %p84
      %p86 = scmp.ne.s32.totalorder %s75, %s76
      %p87 = scmp.eq.s32.totalorder %s20, 0
      %p88 = por %p86, %p87
      %p89 = scmp.ne.s32.totalorder %s75, %s76
      %p90 = scmp.eq.s32.totalorder %s21, 1
      %p91 = por %p89, %p90
      %p93 = scmp.ne.s32.totalorder %s76, %s92
      %p94 = scmp.eq.s32.totalorder %s21, 0
      %p95 = por %p93, %p94
      %p96 = scmp.le.s32.totalorder 1, %s15
      %p97 = scmp.lt.s32.totalorder %s15, 3
      %p98 = pnand %p96, %p97
      %p99 = pneg %p98
      // Predicated region
      $region9: #{tpu_custom_call.1} parent=5 // pred_check
        _
      $region10: #{tpu_custom_call.1} parent=5 // pred_check_branch
        %101 = sbr.rel (%p98) target = $region12
      $region11: #{tpu_custom_call.1} parent=5 // pred_region
        %s102 = ssub.s32 %s15, 1
        // Predicated region
        $region13: #{tpu_custom_call.1} parent=11 // pred_check
          %p103 = pneg %p36
        $region14: #{tpu_custom_call.1} parent=11 // pred_check_branch
          %105 = sbr.rel (%p103) target = $region16
        $region15: #{tpu_custom_call.1} parent=11 // pred_region
          _
        $region16: #{tpu_custom_call.1} parent=11 // pred_fallthru
          _
      $region12: #{tpu_custom_call.1} parent=5 // pred_fallthru
        _
      %p106 = scmp.lt.s32.totalorder %s15, 2
      // Predicated region
      $region17: #{tpu_custom_call.1} parent=5 // pred_check
        %p107 = pneg %p106
      $region18: #{tpu_custom_call.1} parent=5 // pred_check_branch
        %109 = sbr.rel (%p107) target = $region20
      $region19: #{tpu_custom_call.1} parent=5 // pred_region
        // Predicated region
        $region21: #{tpu_custom_call.1} parent=19 // pred_check
          %p110 = pneg %p56
        $region22: #{tpu_custom_call.1} parent=19 // pred_check_branch
          %112 = sbr.rel (%p110) target = $region24
        $region23: #{tpu_custom_call.1} parent=19 // pred_region
          %s113 = sand.u32 %s46, 1
          %s114 = scalar_lea.sflag [#allocation4], %s113
          %s115 = sand.u32 %s46, 1
          %s116 = smul.addr %s115, 8
          %s117 = scalar_lea.vmem [#allocation3], %s116
          %s119 = ssub.s32 128, 128
          %120 = vsyncadd %s114, %s119
          %s121 = smul.addr %s15, 128
          %s122 = scalar_lea.hbm %s1, %s121
          %s124 = sshll.u32 %s117, 4
          %s125 = int_to_ptr.vmem [resolvable:$true] %s124
          %127 = dma.hbm_to_vmem [thread:$0]  %s122, 128, %s125, %s114
        $region24: #{tpu_custom_call.1} parent=19 // pred_fallthru
          _
      $region20: #{tpu_custom_call.1} parent=5 // pred_fallthru
        _
      %p128 = scmp.le.s32.totalorder 1, %s15
      %p129 = scmp.lt.s32.totalorder %s15, 3
      %p130 = pnand %p128, %p129
      %p131 = pneg %p130
      // Predicated region
      $region25: #{tpu_custom_call.1} parent=5 // pred_check
        _
      $region26: #{tpu_custom_call.1} parent=5 // pred_check_branch
        %133 = sbr.rel (%p130) target = $region28
      $region27: #{tpu_custom_call.1} parent=5 // pred_region
        %s134 = ssub.s32 %s15, 1
        %s135 = sand.u32 %s49, 1
        %s136 = scalar_lea.sflag [#allocation4], %s135
        %s137 = sand.u32 %s49, 1
        %s138 = smul.addr %s137, 8
        %s139 = scalar_lea.vmem [#allocation3], %s138
        // Predicated region
        $region29: #{tpu_custom_call.1} parent=27 // pred_check
          %p140 = pneg %p62
        $region30: #{tpu_custom_call.1} parent=27 // pred_check_branch
          %142 = sbr.rel (%p140) target = $region32
        $region31: #{tpu_custom_call.1} parent=27 // pred_region
          %143 = dma.done %s136, 128
        $region32: #{tpu_custom_call.1} parent=27 // pred_fallthru
          _
        %p144 = pneg %p36
        %p145 = pneg %p33
        %s146 = sand.u32 %s49, 1
        %s147 = scalar_lea.sflag [#allocation4], %s146
        %s148 = sand.u32 %s49, 1
        %s149 = smul.addr %s148, 8
        %s150 = scalar_lea.vmem [#allocation3], %s149
        %p151 = pneg %p62
        %p152 = pneg %p59
        %p153 = pneg %p88
        %p154 = pneg %p85
        %s155 = sand.u32 %s75, 1
        %s156 = scalar_lea.sflag [#allocation5], %s155
        %s157 = sand.u32 %s75, 1
        %s158 = smul.addr %s157, 8
        %s159 = scalar_lea.vmem [#allocation6], %s158
        %s160 = sld [smem:[#allocation2]]
        %v161 = vld [vmem:[%s139] sm:$0xff]
        %v162 = vstv %s160
        %v163 = vmul.f32 %v162, %v161
        %v164 = vand.u32 2147483647, %v163
        %v165 = vsub.f32 0.0, %v164
        %v166 = vmul.f32 %v165, 1.442695
        %v167 = vpow.pop %v166
        %vm168 = vcmp.ge.f32.partialorder %v163, 0.0
        %v169 = vsel %vm168, 1.0, %v167
        %v170 = vadd.f32 %v167, 1.0
        %v171 = vrcp.pop %v170
        %v172 = vmul.f32 %v169, %v171
        %v173 = vmul.f32 %v161, %v172
        %174 = vst [vmem:[%s159] sm:$0xff] %v173
        %s175 = sand.u32 %s75, 1
        %s176 = scalar_lea.sflag [#allocation5], %s175
        %s177 = sand.u32 %s75, 1
        %s178 = smul.addr %s177, 8
        %s179 = scalar_lea.vmem [#allocation6], %s178
        // Predicated region
        $region33: #{tpu_custom_call.1} parent=27 // pred_check
          %p180 = pneg %p85
        $region34: #{tpu_custom_call.1} parent=27 // pred_check_branch
          %182 = sbr.rel (%p180) target = $region36
        $region35: #{tpu_custom_call.1} parent=27 // pred_region
          %s184 = ssub.s32 128, 128
          %185 = vsyncadd %s176, %s184
          %s186 = smul.addr %s20, 128
          %s187 = scalar_lea.hbm %s2, %s186
          %s189 = sshll.u32 %s179, 4
          %s190 = int_to_ptr.vmem [resolvable:$true] %s189
          %192 = dma.vmem_to_hbm [thread:$0]  %s190, 128, %s187, %s176
        $region36: #{tpu_custom_call.1} parent=27 // pred_fallthru
          _
      $region28: #{tpu_custom_call.1} parent=5 // pred_fallthru
        _
      %p193 = scmp.le.s32.totalorder 2, %s15
      // Predicated region
      $region37: #{tpu_custom_call.1} parent=5 // pred_check
        %p194 = pneg %p193
      $region38: #{tpu_custom_call.1} parent=5 // pred_check_branch
        %196 = sbr.rel (%p194) target = $region40
      $region39: #{tpu_custom_call.1} parent=5 // pred_region
        %s197 = ssub.s32 %s15, 2
        // Predicated region
        $region41: #{tpu_custom_call.1} parent=39 // pred_check
          %p198 = pneg %p91
        $region42: #{tpu_custom_call.1} parent=39 // pred_check_branch
          %200 = sbr.rel (%p198) target = $region44
        $region43: #{tpu_custom_call.1} parent=39 // pred_region
          %s201 = sand.u32 %s76, 1
          %s202 = scalar_lea.sflag [#allocation5], %s201
          %s203 = sand.u32 %s76, 1
          %s204 = smul.addr %s203, 8
          %s205 = scalar_lea.vmem [#allocation6], %s204
          %206 = dma.done %s202, 128
        $region44: #{tpu_custom_call.1} parent=39 // pred_fallthru
          _
      $region40: #{tpu_custom_call.1} parent=5 // pred_fallthru
        _
    $region6: #{tpu_custom_call.1} parent=1 // loop_footer
      %s19 = sadd.s32 1, %s15
    $region7: #{tpu_custom_call.1} parent=1 // loop_footer_branch
      %14 = sbr.rel target = $region3
    $region8: #{tpu_custom_call.1} parent=1 // loop_exit
      _
    %207 = vsyncpa [#allocation4], 1
    %s208 = scalar_lea.sflag [#allocation4], 1
    %209 = vsyncpa %s208, 1
    %210 = vsyncpa [#allocation5], 1
    %s211 = scalar_lea.sflag [#allocation5], 1
    %212 = vsyncpa %s211, 1

</llo_original>
